<compile_context>
chip_gen: v5e
topology: v5e:2x2
jax: 0.10.0
libtpu: 0.0.40
codegen_flags: <defaults>
</compile_context>

<pallas_src>
import functools

import jax
import jax.numpy as jnp
from jax.experimental import pallas as pl
from jax.experimental.pallas import tpu as pltpu

_VMEM_SPEC = pl.BlockSpec(memory_space=pltpu.MemorySpace.VMEM)


def _round_up(n, m):
    return (n + m - 1) // m * m


# -----------------------------------------------------------------------------
# Fused kernel: num_layers LSTM-cell steps (seq_len == 1) + Linear head
# -----------------------------------------------------------------------------
def _fused_lstm_fc_kernel(x_ref, wih_ref, b_ref, wfc_ref, bfc_ref, o_ref, *,
                          hidden_dim, num_layers):
    """Whole forward pass in VMEM.

    x_ref:   (B_pad, D_pad)        input, zero-padded to (8k, max(D_in, H))
    wih_ref: (L, D_pad, 4H)        stacked W_ih^T (layer 0 zero-padded rows)
    b_ref:   (L, 1, 4H)            stacked b_ih + b_hh
    wfc_ref: (H, OUT_PAD)          FC W^T, lane-padded to a multiple of 128
    bfc_ref: (1, OUT_PAD)          FC bias, lane-padded
    o_ref:   (B_pad, OUT_PAD)      lane-dense FC output (sliced in wrapper)
    Gate order matches PyTorch: [i, f, g, o].
    """
    H = hidden_dim
    d_pad = wih_ref.shape[1]

    inp = x_ref[...]                                    # (B_pad, D_pad)
    h = None
    for layer in range(num_layers):                     # static unrolled loop
        gates = (
            jnp.dot(inp, wih_ref[layer], preferred_element_type=jnp.float32)
            + b_ref[layer]
        )
        # NOTE: lane slices at H-boundaries inside one vreg (cheap XLU work at
        # H=32; keep H a multiple of 128 if hidden_dim ever grows).
        i_g = jax.nn.sigmoid(gates[:, 0 * H:1 * H])
        # forget gate skipped: c_prev == 0 (seq_len == 1, zero initial state)
        g_g = jnp.tanh(gates[:, 2 * H:3 * H])
        o_g = jax.nn.sigmoid(gates[:, 3 * H:4 * H])

        c_new = i_g * g_g
        h = o_g * jnp.tanh(c_new)

        if H < d_pad and layer + 1 < num_layers:
            inp = jnp.pad(h, ((0, 0), (0, d_pad - H)))  # only if input_dim > H
        else:
            inp = h

    o_ref[...] = (
        jnp.dot(h, wfc_ref[...], preferred_element_type=jnp.float32)
        + bfc_ref[...]
    )


# -----------------------------------------------------------------------------
# Wrapper (single grid-less pallas_call; whole problem is one VMEM tile)
# -----------------------------------------------------------------------------
@functools.partial(jax.jit,
                   static_argnames=("hidden_dim", "num_layers", "output_dim"))
def lstm_model_forward(x, params, *, hidden_dim, num_layers, output_dim):
    """Equivalent of LSTMModel.forward (eval mode), x: (batch, input_dim)."""
    B, input_dim = x.shape
    wih = params["wih_stack"]                       # (L, D_pad, 4H)
    d_pad = wih.shape[1]
    b_pad = _round_up(B, 8)                         # f32 sublane tile
    x_pad = jnp.zeros((b_pad, d_pad), jnp.float32).at[:B, :input_dim].set(x)

    out_pad_dim = params["wfc_t_pad"].shape[1]
    kernel = functools.partial(_fused_lstm_fc_kernel,
                               hidden_dim=hidden_dim, num_layers=num_layers)
    out_pad = pl.pallas_call(
        kernel,
        out_shape=jax.ShapeDtypeStruct((b_pad, out_pad_dim), jnp.float32),
        in_specs=[_VMEM_SPEC] * 5,
        out_specs=_VMEM_SPEC,
    )(x_pad, wih, params["b_stack"], params["wfc_t_pad"], params["bfc_pad"])

    return out_pad[:B, :output_dim]


# -----------------------------------------------------------------------------
# Parameter construction (nn.LSTM / nn.Linear shapes, pre-transposed & padded)
# -----------------------------------------------------------------------------
def init_params(key, input_dim, hidden_dim, output_dim, num_layers):
    """Deterministic synthetic parameters, already laid out for the kernel."""
    H = hidden_dim
    d_pad = max(input_dim, hidden_dim)
    k_lstm = 1.0 / jnp.sqrt(jnp.float32(hidden_dim))

    wih_stack = jnp.zeros((num_layers, d_pad, 4 * H), jnp.float32)
    b_stack = jnp.zeros((num_layers, 1, 4 * H), jnp.float32)
    for layer in range(num_layers):
        d_in = input_dim if layer == 0 else hidden_dim
        key, k1, k2, k3, k4 = jax.random.split(key, 5)
        w_ih = jax.random.uniform(k1, (4 * H, d_in), jnp.float32,
                                  -k_lstm, k_lstm)
        # W_hh is sampled for parity with nn.LSTM init but is algebraically
        # dead here (seq_len == 1, h0 == 0), so it is never stored or used.
        _w_hh = jax.random.uniform(k2, (4 * H, H), jnp.float32,
                                   -k_lstm, k_lstm)
        b_ih = jax.random.uniform(k3, (4 * H,), jnp.float32, -k_lstm, k_lstm)
        b_hh = jax.random.uniform(k4, (4 * H,), jnp.float32, -k_lstm, k_lstm)
        wih_stack = wih_stack.at[layer, :d_in, :].set(w_ih.T)      # (d_in, 4H)
        b_stack = b_stack.at[layer, 0, :].set(b_ih + b_hh)

    k_fc = 1.0 / jnp.sqrt(jnp.float32(hidden_dim))
    key, k5, k6 = jax.random.split(key, 3)
    w_fc = jax.random.uniform(k5, (output_dim, hidden_dim), jnp.float32,
                              -k_fc, k_fc)
    b_fc = jax.random.uniform(k6, (output_dim,), jnp.float32, -k_fc, k_fc)

    out_pad = _round_up(output_dim, 128)            # lane-dense FC output
    wfc_t_pad = jnp.zeros((H, out_pad), jnp.float32).at[:, :output_dim].set(
        w_fc.T)
    bfc_pad = jnp.zeros((1, out_pad), jnp.float32).at[:, :output_dim].set(b_fc)

    return {
        "wih_stack": wih_stack,      # (L, D_pad, 4H)
        "b_stack": b_stack,          # (L, 1, 4H)
        "wfc_t_pad": wfc_t_pad,      # (H, OUT_PAD)
        "bfc_pad": bfc_pad,          # (1, OUT_PAD)
    }


if __name__ == "__main__":
    INPUT_DIM = 8
    HIDDEN_DIM = 32
    OUTPUT_DIM = 1
    NUM_LAYERS = 2
    BATCH = 4

    key = jax.random.PRNGKey(0)
    key, kx, kp = jax.random.split(key, 3)
    x = jax.random.normal(kx, (BATCH, INPUT_DIM), dtype=jnp.float32)
    params = init_params(kp, INPUT_DIM, HIDDEN_DIM, OUTPUT_DIM, NUM_LAYERS)

    out = lstm_model_forward(x, params, hidden_dim=HIDDEN_DIM,
                             num_layers=NUM_LAYERS, output_dim=OUTPUT_DIM)
    out = jax.block_until_ready(out)
    assert out.shape == (BATCH, OUTPUT_DIM), out.shape
    print("KERNEL_OK")
</pallas_src>

<mosaic_0001>
module attributes {stable_mosaic.version = 11 : i64} {
  func.func @_fused_lstm_fc_kernel(%arg0: memref<8x32xf32, #tpu.memory_space<vmem>>, %arg1: memref<2x32x128xf32, #tpu.memory_space<vmem>>, %arg2: memref<2x1x128xf32, #tpu.memory_space<vmem>>, %arg3: memref<32x128xf32, #tpu.memory_space<vmem>>, %arg4: memref<1x128xf32, #tpu.memory_space<vmem>>, %arg5: memref<8x128xf32, #tpu.memory_space<vmem>>) attributes {dimension_semantics = [], scalar_prefetch = 0 : i64, scratch_operands = 0 : i64, tpu.core_type = #tpu.core_type<tc>} {
    %c0 = arith.constant 0 : index
    %c0_0 = arith.constant 0 : index
    %0 = vector.load %arg0[%c0, %c0_0] : memref<8x32xf32, #tpu.memory_space<vmem>>, vector<8x32xf32>
    %c0_1 = arith.constant 0 : index
    %c0_2 = arith.constant 0 : index
    %c0_3 = arith.constant 0 : index
    %1 = vector.load %arg1[%c0_1, %c0_2, %c0_3] : memref<2x32x128xf32, #tpu.memory_space<vmem>>, vector<1x32x128xf32>
    %2 = vector.shape_cast %1 : vector<1x32x128xf32> to vector<32x128xf32>
    %cst = arith.constant dense<0.000000e+00> : vector<8x128xf32>
    %3 = tpu.matmul %0, %2, %cst {dimension_numbers = #tpu.dot_dimension_numbers<[1], [0], [0], [1], [0, 0, 1, 1], [], []>} : vector<8x32xf32>, vector<32x128xf32>, vector<8x128xf32> -> vector<8x128xf32>
    %c0_4 = arith.constant 0 : index
    %c0_5 = arith.constant 0 : index
    %c0_6 = arith.constant 0 : index
    %4 = vector.load %arg2[%c0_4, %c0_5, %c0_6] : memref<2x1x128xf32, #tpu.memory_space<vmem>>, vector<1x1x128xf32>
    %5 = vector.shape_cast %4 : vector<1x1x128xf32> to vector<1x128xf32>
    %6 = vector.broadcast %5 : vector<1x128xf32> to vector<8x128xf32>
    %7 = arith.addf %3, %6 : vector<8x128xf32>
    %8 = vector.extract_strided_slice %7 {offsets = [0, 0], sizes = [8, 32], strides = [1, 1]} : vector<8x128xf32> to vector<8x32xf32>
    %9 = arith.negf %8 : vector<8x32xf32>
    %10 = math.exp %9 : vector<8x32xf32>
    %cst_7 = arith.constant 1.000000e+00 : f32
    %11 = vector.broadcast %cst_7 : f32 to vector<8x32xf32>
    %12 = arith.addf %11, %10 : vector<8x32xf32>
    %13 = arith.divf %11, %12 : vector<8x32xf32>
    %14 = vector.extract_strided_slice %7 {offsets = [0, 64], sizes = [8, 32], strides = [1, 1]} : vector<8x128xf32> to vector<8x32xf32>
    %15 = math.tanh %14 : vector<8x32xf32>
    %16 = vector.extract_strided_slice %7 {offsets = [0, 96], sizes = [8, 32], strides = [1, 1]} : vector<8x128xf32> to vector<8x32xf32>
    %17 = arith.negf %16 : vector<8x32xf32>
    %18 = math.exp %17 : vector<8x32xf32>
    %cst_8 = arith.constant 1.000000e+00 : f32
    %19 = vector.broadcast %cst_8 : f32 to vector<8x32xf32>
    %20 = arith.addf %19, %18 : vector<8x32xf32>
    %21 = arith.divf %19, %20 : vector<8x32xf32>
    %22 = arith.mulf %13, %15 : vector<8x32xf32>
    %23 = math.tanh %22 : vector<8x32xf32>
    %24 = arith.mulf %21, %23 : vector<8x32xf32>
    %c1 = arith.constant 1 : index
    %c0_9 = arith.constant 0 : index
    %c0_10 = arith.constant 0 : index
    %25 = vector.load %arg1[%c1, %c0_9, %c0_10] : memref<2x32x128xf32, #tpu.memory_space<vmem>>, vector<1x32x128xf32>
    %26 = vector.shape_cast %25 : vector<1x32x128xf32> to vector<32x128xf32>
    %cst_11 = arith.constant dense<0.000000e+00> : vector<8x128xf32>
    %27 = tpu.matmul %24, %26, %cst_11 {dimension_numbers = #tpu.dot_dimension_numbers<[1], [0], [0], [1], [0, 0, 1, 1], [], []>} : vector<8x32xf32>, vector<32x128xf32>, vector<8x128xf32> -> vector<8x128xf32>
    %c1_12 = arith.constant 1 : index
    %c0_13 = arith.constant 0 : index
    %c0_14 = arith.constant 0 : index
    %28 = vector.load %arg2[%c1_12, %c0_13, %c0_14] : memref<2x1x128xf32, #tpu.memory_space<vmem>>, vector<1x1x128xf32>
    %29 = vector.shape_cast %28 : vector<1x1x128xf32> to vector<1x128xf32>
    %30 = vector.broadcast %29 : vector<1x128xf32> to vector<8x128xf32>
    %31 = arith.addf %27, %30 : vector<8x128xf32>
    %32 = vector.extract_strided_slice %31 {offsets = [0, 0], sizes = [8, 32], strides = [1, 1]} : vector<8x128xf32> to vector<8x32xf32>
    %33 = arith.negf %32 : vector<8x32xf32>
    %34 = math.exp %33 : vector<8x32xf32>
    %cst_15 = arith.constant 1.000000e+00 : f32
    %35 = vector.broadcast %cst_15 : f32 to vector<8x32xf32>
    %36 = arith.addf %35, %34 : vector<8x32xf32>
    %37 = arith.divf %35, %36 : vector<8x32xf32>
    %38 = vector.extract_strided_slice %31 {offsets = [0, 64], sizes = [8, 32], strides = [1, 1]} : vector<8x128xf32> to vector<8x32xf32>
    %39 = math.tanh %38 : vector<8x32xf32>
    %40 = vector.extract_strided_slice %31 {offsets = [0, 96], sizes = [8, 32], strides = [1, 1]} : vector<8x128xf32> to vector<8x32xf32>
    %41 = arith.negf %40 : vector<8x32xf32>
    %42 = math.exp %41 : vector<8x32xf32>
    %cst_16 = arith.constant 1.000000e+00 : f32
    %43 = vector.broadcast %cst_16 : f32 to vector<8x32xf32>
    %44 = arith.addf %43, %42 : vector<8x32xf32>
    %45 = arith.divf %43, %44 : vector<8x32xf32>
    %46 = arith.mulf %37, %39 : vector<8x32xf32>
    %47 = math.tanh %46 : vector<8x32xf32>
    %48 = arith.mulf %45, %47 : vector<8x32xf32>
    %c0_17 = arith.constant 0 : index
    %c0_18 = arith.constant 0 : index
    %49 = vector.load %arg3[%c0_17, %c0_18] : memref<32x128xf32, #tpu.memory_space<vmem>>, vector<32x128xf32>
    %cst_19 = arith.constant dense<0.000000e+00> : vector<8x128xf32>
    %50 = tpu.matmul %48, %49, %cst_19 {dimension_numbers = #tpu.dot_dimension_numbers<[1], [0], [0], [1], [0, 0, 1, 1], [], []>} : vector<8x32xf32>, vector<32x128xf32>, vector<8x128xf32> -> vector<8x128xf32>
    %c0_20 = arith.constant 0 : index
    %c0_21 = arith.constant 0 : index
    %51 = vector.load %arg4[%c0_20, %c0_21] : memref<1x128xf32, #tpu.memory_space<vmem>>, vector<1x128xf32>
    %52 = vector.broadcast %51 : vector<1x128xf32> to vector<8x128xf32>
    %53 = arith.addf %50, %52 : vector<8x128xf32>
    %c0_22 = arith.constant 0 : index
    %c0_23 = arith.constant 0 : index
    %54 = vector.load %arg5[%c0_22, %c0_23] : memref<8x128xf32, #tpu.memory_space<vmem>>, vector<8x128xf32>
    tpu.vector_store %arg5[%c0_22, %c0_23], %53 {strides = array<i32>} : memref<8x128xf32, #tpu.memory_space<vmem>>, vector<8x128xf32>,
    return
  }
}

</mosaic_0001>

<llo_original>
// kernel: lstm_model_forward.1
$region0: #{lstm_model_forward.1}
  #allocation0 [shape = 'u32[]', space=smem, size = 0x4, offset = 0x4, fixed_abs, tag = 'smem constant byte address 0x4 - core index']
  #allocation1 [shape = 'u32[72,128]{1,0:T(1,128)}', space=vmem, size = 0x9000, scoped, tag = 'internal scratch']
  %s0 = inlined_call_operand.vmem [shape: f32[8,32], index: 0, kind: input, shape index: {}]
  %s1 = inlined_call_operand.hbm [shape: f32[2,32,128], index: 1, kind: input, shape index: {}]
  %s2 = inlined_call_operand.vmem [shape: f32[2,1,128], index: 2, kind: input, shape index: {}]
  %s3 = inlined_call_operand.hbm [shape: f32[32,128], index: 3, kind: input, shape index: {}]
  %s4 = inlined_call_operand.vmem [shape: f32[1,128], index: 4, kind: input, shape index: {}]
  %s5 = inlined_call_operand.vmem [shape: f32[8,128], index: 5, kind: output, shape index: {}]
  %s6 = sld [smem:[#allocation0]]
  $region38: #{lstm_model_forward.1} parent=0
    _
  %s8 = ssub.s32 1, %s6
  %s9 = scalar_select 0, %s8, %s6
  $region1: #{lstm_model_forward.1} parent=0
    #allocation2 [shape = 'u8[32768]{0}', space=vmem, size = 0x8000, scoped, tag = 'input window, operand 1, single buffered']
    #allocation3 [shape = 's32[1]{0}', space=sflag, size = 0x4, scoped, tag = 'scoped memory for lstm_model_forward.1']
    #allocation4 [shape = 'u8[16384]{0}', space=vmem, size = 0x4000, scoped, tag = 'input window, operand 3, single buffered']
    #allocation5 [shape = 's32[1]{0}', space=sflag, size = 0x4, scoped, tag = 'scoped memory for lstm_model_forward.1']
    %10 = vsyncpa [#allocation3], 0
    %11 = vsyncpa [#allocation5], 0
    // Predicated region
    $region2: #{lstm_model_forward.1} parent=1 // pred_check
      _
    $region3: #{lstm_model_forward.1} parent=1 // pred_check_branch
      %13 = sbr.rel (0) target = $region5
    $region4: #{lstm_model_forward.1} parent=1 // pred_region
      _
    $region5: #{lstm_model_forward.1} parent=1 // pred_fallthru
      _
    // Predicated region
    $region6: #{lstm_model_forward.1} parent=1 // pred_check
      _
    $region7: #{lstm_model_forward.1} parent=1 // pred_check_branch
      %15 = sbr.rel (0) target = $region9
    $region8: #{lstm_model_forward.1} parent=1 // pred_region
      %17 = vsyncadd [#allocation3], 0
      %s18 = sshll.u32 %s1, 4
      %s19 = int_to_ptr.hbm [resolvable:$true] %s18
      %s20 = sshll.u32 [#allocation2], 4
      %s21 = int_to_ptr.vmem [resolvable:$true] %s20
      %26 = dma.hbm_to_vmem [thread:$0]  %s19, 1024, %s21, [#allocation3], 128, 128, 8
    $region9: #{lstm_model_forward.1} parent=1 // pred_fallthru
      _
    // Predicated region
    $region10: #{lstm_model_forward.1} parent=1 // pred_check
      _
    $region11: #{lstm_model_forward.1} parent=1 // pred_check_branch
      %28 = sbr.rel (0) target = $region13
    $region12: #{lstm_model_forward.1} parent=1 // pred_region
      _
    $region13: #{lstm_model_forward.1} parent=1 // pred_fallthru
      _
    // Predicated region
    $region14: #{lstm_model_forward.1} parent=1 // pred_check
      _
    $region15: #{lstm_model_forward.1} parent=1 // pred_check_branch
      %30 = sbr.rel (0) target = $region17
    $region16: #{lstm_model_forward.1} parent=1 // pred_region
      %32 = vsyncadd [#allocation5], 0
      %s33 = sshll.u32 %s3, 4
      %s34 = int_to_ptr.hbm [resolvable:$true] %s33
      %s35 = sshll.u32 [#allocation4], 4
      %s36 = int_to_ptr.vmem [resolvable:$true] %s35
      %41 = dma.hbm_to_vmem [thread:$0]  %s34, 512, %s36, [#allocation5], 128, 128, 8
    $region17: #{lstm_model_forward.1} parent=1 // pred_fallthru
      _
    // Predicated region
    $region18: #{lstm_model_forward.1} parent=1 // pred_check
      _
    $region19: #{lstm_model_forward.1} parent=1 // pred_check_branch
      %43 = sbr.rel (0) target = $region21
    $region20: #{lstm_model_forward.1} parent=1 // pred_region
      _
    $region21: #{lstm_model_forward.1} parent=1 // pred_fallthru
      _
    // Predicated region
    $region22: #{lstm_model_forward.1} parent=1 // pred_check
      _
    $region23: #{lstm_model_forward.1} parent=1 // pred_check_branch
      %45 = sbr.rel (0) target = $region25
    $region24: #{lstm_model_forward.1} parent=1 // pred_region
      %47 = dma.done [#allocation3], 1024
    $region25: #{lstm_model_forward.1} parent=1 // pred_fallthru
      _
    // Predicated region
    $region26: #{lstm_model_forward.1} parent=1 // pred_check
      _
    $region27: #{lstm_model_forward.1} parent=1 // pred_check_branch
      %49 = sbr.rel (0) target = $region29
    $region28: #{lstm_model_forward.1} parent=1 // pred_region
      %51 = dma.done [#allocation5], 512
    $region29: #{lstm_model_forward.1} parent=1 // pred_fallthru
      _
    %v52 = vld [vmem:[%s0] sm:$0xff]
    %v53 = vld [vmem:[#allocation2] sm:$0xff]
    %v54 = vld [vmem:[#allocation2 + $0x8] sm:$0xff]
    %v55 = vld [vmem:[#allocation2 + $0x10] sm:$0xff]
    %v56 = vld [vmem:[#allocation2 + $0x18] sm:$0xff]
    %v57 = vld [vmem:[%s2] sm:$0x1]
    %v59 = vperm.slane %v57, 0
    %vm61 = vcmask 261120
    %v63 = vsel %vm61, %v52, 0
    %65 = vmatpush.msra.mxu0 0.0
    %66 = vmatpush.msra.mxu0 0.0
    %67 = vmatpush.msra.mxu0 0.0
    %68 = vmatpush.msra.mxu0 0.0
    %69 = vmatpush.msra.mxu0 0.0
    %70 = vmatpush.msra.mxu0 0.0
    %71 = vmatpush.msra.mxu0 0.0
    %72 = vmatpush.msra.mxu0 0.0
    %73 = vmatpush.msra.mxu0 0.0
    %74 = vmatpush.msra.mxu0 0.0
    %75 = vmatpush.msra.mxu0 0.0
    %76 = vmatpush.msra.mxu0 0.0
    %77 = vmatpush.msra.mxu0 %v56
    %78 = vmatpush.msra.mxu0 %v55
    %79 = vmatpush.msra.mxu0 %v54
    %80 = vmatpush.msra.mxu0 %v53
    %81 = vmatmul.f32.gmra.mxu0 %v63
    %v82 = vpop.f32.mrf.mxu0
    %v83 = vadd.f32 %v59, %v82
    %84 = vdwg.mxu0
    %v85 = vxor.u32 %v83, 2147483648
    %v86 = vmul.f32 %v85, 1.442695
    %v87 = vpow.pop %v86
    %v88 = vadd.f32 %v87, 1.0
    %v89 = vrcp.pop %v88
    %v90 = vmul.f32 %v88, %v89
    %v91 = vsub.f32 1.0, %v90
    %v92 = vmul.f32 %v89, %v91
    %v93 = vadd.f32 %v89, %v92
    %vm94 = vweird.f32 %v88
    %vm95 = vweird.f32 %v89
    %vm96 = vmor %vm94, %vm95
    %v97 = vsel %vm96, %v89, %v93
    %v98 = vand.u32 2147483647, %v88
    %vm99 = vcmp.eq.f32.partialorder %v98, 8.507059e+37
    %v100 = vand.u32 %v88, 2147483648
    %v101 = vor.u32 1.1754944e-38, %v100
    %v102 = vsel %vm99, %v101, %v97
    %v103 = vmul.f32 1.0, %v102
    %v104 = vtanh.pop %v83
    %106 = vrot.lane.b32.xlu0 %v104, 64
    %v107 = vpop.permute.xlu0 %106
    %v109 = vmul.f32 %v103, %v107
    %v110 = vtanh.pop %v109
    %112 = vrot.lane.b32.xlu0 %v110, 96
    %v113 = vpop.permute.xlu0 %112
    %v115 = vmul.f32 %v103, %v113
    %s116 = scalar_lea.vmem [#allocation2], 32
    %v117 = vld [vmem:[%s116] sm:$0xff]
    %v118 = vld [vmem:[%s116 + $0x8] sm:$0xff]
    %v119 = vld [vmem:[%s116 + $0x10] sm:$0xff]
    %v120 = vld [vmem:[%s116 + $0x18] sm:$0xff]
    %s121 = scalar_lea.vmem %s2, 1
    %v122 = vld [vmem:[%s121] sm:$0x1]
    %v124 = vperm.slane %v122, 0
    %127 = vrot.lane.b32.xlu0 %v115, 32
    %v128 = vpop.permute.xlu0 %127
    %v129 = vsel %vm61, %v128, 0
    %131 = vmatpush.msra.mxu0 0.0
    %132 = vmatpush.msra.mxu0 0.0
    %133 = vmatpush.msra.mxu0 0.0
    %134 = vmatpush.msra.mxu0 0.0
    %135 = vmatpush.msra.mxu0 0.0
    %136 = vmatpush.msra.mxu0 0.0
    %137 = vmatpush.msra.mxu0 0.0
    %138 = vmatpush.msra.mxu0 0.0
    %139 = vmatpush.msra.mxu0 0.0
    %140 = vmatpush.msra.mxu0 0.0
    %141 = vmatpush.msra.mxu0 0.0
    %142 = vmatpush.msra.mxu0 0.0
    %143 = vmatpush.msra.mxu0 %v120
    %144 = vmatpush.msra.mxu0 %v119
    %145 = vmatpush.msra.mxu0 %v118
    %146 = vmatpush.msra.mxu0 %v117
    %147 = vmatmul.f32.gmra.mxu0 %v129
    %v148 = vpop.f32.mrf.mxu0
    %v149 = vadd.f32 %v124, %v148
    %150 = vdwg.mxu0
    %v151 = vxor.u32 %v149, 2147483648
    %v152 = vmul.f32 %v151, 1.442695
    %v153 = vpow.pop %v152
    %v154 = vadd.f32 %v153, 1.0
    %v155 = vrcp.pop %v154
    %v156 = vmul.f32 %v154, %v155
    %v157 = vsub.f32 1.0, %v156
    %v158 = vmul.f32 %v155, %v157
    %v159 = vadd.f32 %v155, %v158
    %vm160 = vweird.f32 %v154
    %vm161 = vweird.f32 %v155
    %vm162 = vmor %vm160, %vm161
    %v163 = vsel %vm162, %v155, %v159
    %v164 = vand.u32 2147483647, %v154
    %vm165 = vcmp.eq.f32.partialorder %v164, 8.507059e+37
    %v166 = vand.u32 %v154, 2147483648
    %v167 = vor.u32 1.1754944e-38, %v166
    %v168 = vsel %vm165, %v167, %v163
    %v169 = vmul.f32 1.0, %v168
    %v170 = vtanh.pop %v149
    %172 = vrot.lane.b32.xlu0 %v170, 64
    %v173 = vpop.permute.xlu0 %172
    %v175 = vmul.f32 %v169, %v173
    %v176 = vtanh.pop %v175
    %178 = vrot.lane.b32.xlu0 %v176, 96
    %v179 = vpop.permute.xlu0 %178
    %v181 = vmul.f32 %v169, %v179
    %v182 = vld [vmem:[#allocation4] sm:$0xff]
    %v183 = vld [vmem:[#allocation4 + $0x8] sm:$0xff]
    %v184 = vld [vmem:[#allocation4 + $0x10] sm:$0xff]
    %v185 = vld [vmem:[#allocation4 + $0x18] sm:$0xff]
    %v186 = vld [vmem:[%s4] sm:$0x1]
    %v188 = vperm.slane %v186, 0
    %191 = vrot.lane.b32.xlu0 %v181, 32
    %v192 = vpop.permute.xlu0 %191
    %v193 = vsel %vm61, %v192, 0
    %195 = vmatpush.msra.mxu0 0.0
    %196 = vmatpush.msra.mxu0 0.0
    %197 = vmatpush.msra.mxu0 0.0
    %198 = vmatpush.msra.mxu0 0.0
    %199 = vmatpush.msra.mxu0 0.0
    %200 = vmatpush.msra.mxu0 0.0
    %201 = vmatpush.msra.mxu0 0.0
    %202 = vmatpush.msra.mxu0 0.0
    %203 = vmatpush.msra.mxu0 0.0
    %204 = vmatpush.msra.mxu0 0.0
    %205 = vmatpush.msra.mxu0 0.0
    %206 = vmatpush.msra.mxu0 0.0
    %207 = vmatpush.msra.mxu0 %v185
    %208 = vmatpush.msra.mxu0 %v184
    %209 = vmatpush.msra.mxu0 %v183
    %210 = vmatpush.msra.mxu0 %v182
    %211 = vmatmul.f32.gmra.mxu0 %v193
    %v212 = vpop.f32.mrf.mxu0
    %v213 = vadd.f32 %v188, %v212
    %214 = vdwg.mxu0
    %215 = vst [vmem:[%s5] sm:$0xff] %v213
    // Predicated region
    $region30: #{lstm_model_forward.1} parent=1 // pred_check
      _
    $region31: #{lstm_model_forward.1} parent=1 // pred_check_branch
      %217 = sbr.rel (0) target = $region33
    $region32: #{lstm_model_forward.1} parent=1 // pred_region
      _
    $region33: #{lstm_model_forward.1} parent=1 // pred_fallthru
      _
    // Predicated region
    $region34: #{lstm_model_forward.1} parent=1 // pred_check
      _
    $region35: #{lstm_model_forward.1} parent=1 // pred_check_branch
      %219 = sbr.rel (0) target = $region37
    $region36: #{lstm_model_forward.1} parent=1 // pred_region
      _
    $region37: #{lstm_model_forward.1} parent=1 // pred_fallthru
      _
    %220 = vsyncpa [#allocation3], 1
    %221 = vsyncpa [#allocation5], 1

</llo_original>
